<compile_context>
chip_gen: v7x
topology: tpu7x:2x2x1
jax: 0.10.0
libtpu: 0.0.40
codegen_flags: <defaults>
</compile_context>

<pallas_src>
import functools

import jax
import jax.numpy as jnp
from jax.experimental import pallas as pl
from jax.experimental.pallas import tpu as pltpu

LN_EPS = 1e-5  # nn.LayerNorm default


def _round_up(a, m):
    return (a + m - 1) // m * m


def _prenorm_residual_kernel(x_ref, gamma_ref, beta_ref, w_ref, b_ref, o_ref,
                             *, d_true, d_pad):
    # x_ref: (row_tile, Dp) tile of input rows.  Padded lanes (>= d_true) of
    # x / gamma / beta / W / b are all zero, so they contribute nothing to the
    # statistics or the matmul and the padded output columns come out as exact
    # zeros (sliced away in the wrapper).
    x = x_ref[...].astype(jnp.float32)

    # --- LayerNorm over the true feature width (biased variance, PyTorch) ---
    inv_d = 1.0 / d_true
    mean = jnp.sum(x, axis=-1, keepdims=True) * inv_d  # padded lanes are zero
    centered = x - mean
    if d_pad != d_true:
        lane = jax.lax.broadcasted_iota(jnp.int32, x.shape, dimension=1)
        centered = jnp.where(lane < d_true, centered, 0.0)
    var = jnp.sum(centered * centered, axis=-1, keepdims=True) * inv_d
    x_norm = centered * jax.lax.rsqrt(var + LN_EPS)

    # gamma/beta/bias arrive pre-cast to f32 from the wrapper (hoisted cast).
    y = x_norm * gamma_ref[...] + beta_ref[...]

    # --- fn = Linear(dim, dim): y @ W + b, W stored as (in, out) ---
    # Keep W in its native dtype: bf16 models use the MXU's native
    # bf16 x bf16 -> f32 path; f32 models stay f32.
    out = jnp.dot(y.astype(w_ref.dtype), w_ref[...],
                  preferred_element_type=jnp.float32)
    out = out + b_ref[...]

    # --- residual add (f32), then cast back to the model dtype ---
    o_ref[...] = (out + x).astype(o_ref.dtype)


def prenorm_residual(x, gamma, beta, w, b, *, row_tile=None):
    """x: (B, N, D).  gamma/beta: (D,).  w: (D, D) laid out (in, out).  b: (D,)."""
    B, N, D = x.shape
    rows = B * N

    # --- lane padding: present a lane-dense (multiple-of-128) feature axis ---
    Dp = _round_up(D, 128)

    # --- row-tile selection: aligned, many grid steps, VMEM-budgeted (v7x) ---
    itemsize = jnp.dtype(x.dtype).itemsize
    sublane = 8 if itemsize >= 4 else 16
    if row_tile is None:
        # Roughly 10 f32-sized live copies of a (row_tile, Dp) tile exist at
        # once (double-buffered in/out blocks + in-kernel f32 temporaries);
        # keep them under ~16 MiB so the whole kernel stays well inside
        # v7x's 64 MiB VMEM while still using large tiles on v5e/v6e.
        budget_rows = (16 * 1024 * 1024) // (10 * Dp * 4)
        budget_rows = max(sublane, (budget_rows // sublane) * sublane)
        row_tile = max(sublane,
                       min(budget_rows, 512,
                           _round_up(pl.cdiv(rows, 2), sublane)))
    rows_p = _round_up(rows, row_tile)
    grid = (rows_p // row_tile,)

    # --- wrapper-side padding and hoisted f32 casts of the constant params ---
    x2 = x.reshape(rows, D)
    if rows_p != rows or Dp != D:
        x2 = jnp.pad(x2, ((0, rows_p - rows), (0, Dp - D)))
    pad_d = (0, Dp - D)
    gamma_p = jnp.pad(gamma.astype(jnp.float32), pad_d).reshape(1, Dp)
    beta_p = jnp.pad(beta.astype(jnp.float32), pad_d).reshape(1, Dp)
    b_p = jnp.pad(b.astype(jnp.float32), pad_d).reshape(1, Dp)
    w_p = jnp.pad(w, (pad_d, pad_d)) if Dp != D else w

    # TODO(synk): for very large hidden dims (W = Dp*Dp bytes approaching the
    # VMEM budget, e.g. D >= 4096 f32 on v7x), add a second grid axis that
    # tiles W's output columns while keeping the full-D x tile resident for
    # the LayerNorm reduction.
    w_bytes = Dp * Dp * jnp.dtype(w.dtype).itemsize
    assert w_bytes <= 32 * 1024 * 1024, "W too large for single-block residency"

    vmem_est = (
        2 * row_tile * Dp * itemsize      # double-buffered input tiles
        + 2 * row_tile * Dp * itemsize    # double-buffered output tiles
        + w_bytes                         # W (single-buffered)
        + 3 * Dp * 4                      # gamma / beta / bias (f32)
        + 6 * row_tile * Dp * 4           # in-kernel f32 temporaries
    )
    vmem_limit = int(min(max(32 * 1024 * 1024, 2 * vmem_est),
                         48 * 1024 * 1024))

    const = dict(pipeline_mode=pl.Buffered(1))  # single-buffer constant blocks

    out2 = pl.pallas_call(
        functools.partial(_prenorm_residual_kernel, d_true=D, d_pad=Dp),
        out_shape=jax.ShapeDtypeStruct((rows_p, Dp), x.dtype),
        grid_spec=pltpu.PrefetchScalarGridSpec(
            num_scalar_prefetch=0,
            grid=grid,
            in_specs=[
                pl.BlockSpec((row_tile, Dp), lambda i: (i, 0)),     # x row tile
                pl.BlockSpec((1, Dp), lambda i: (0, 0), **const),   # gamma (f32)
                pl.BlockSpec((1, Dp), lambda i: (0, 0), **const),   # beta  (f32)
                pl.BlockSpec((Dp, Dp), lambda i: (0, 0), **const),  # W
                pl.BlockSpec((1, Dp), lambda i: (0, 0), **const),   # bias  (f32)
            ],
            out_specs=pl.BlockSpec((row_tile, Dp), lambda i: (i, 0)),
        ),
        compiler_params=pltpu.CompilerParams(
            dimension_semantics=("parallel",),
            vmem_limit_bytes=vmem_limit,
        ),
    )(x2, gamma_p, beta_p, w_p, b_p)

    return out2[:rows, :D].reshape(B, N, D)


def reference(x, gamma, beta, w, b):
    x32 = x.astype(jnp.float32)
    mean = jnp.mean(x32, axis=-1, keepdims=True)
    var = jnp.mean((x32 - mean) ** 2, axis=-1, keepdims=True)
    y = (x32 - mean) * jax.lax.rsqrt(var + LN_EPS) * gamma + beta
    return (y @ w.astype(jnp.float32) + b + x32).astype(x.dtype)


if __name__ == "__main__":
    B, N, D = 2, 8, 32  # batch, seq, hidden (LayerNorm dim)

    key = jax.random.PRNGKey(0)
    kx, kg, kb, kw, kbias = jax.random.split(key, 5)

    x = jax.random.normal(kx, (B, N, D), dtype=jnp.float32)

    # Deterministic synthetic parameters; shapes follow nn.LayerNorm(dim) and
    # nn.Linear(dim, dim).
    gamma = 1.0 + 0.1 * jax.random.normal(kg, (D,), dtype=jnp.float32)
    beta = 0.1 * jax.random.normal(kb, (D,), dtype=jnp.float32)
    w = jax.random.normal(kw, (D, D), dtype=jnp.float32) / jnp.sqrt(D)  # (in, out)
    b = 0.1 * jax.random.normal(kbias, (D,), dtype=jnp.float32)

    out = prenorm_residual(x, gamma, beta, w, b)
    out = jax.block_until_ready(out)

    ref = reference(x, gamma, beta, w, b)
    assert out.shape == (B, N, D)
    assert jnp.allclose(out, ref, atol=2e-4, rtol=2e-4), "mismatch vs reference"

    print("KERNEL_OK")
</pallas_src>

<mosaic_0001>
module attributes {stable_mosaic.version = 11 : i64} {
  func.func @_prenorm_residual_kernel(%arg0: i32, %arg1: memref<8x128xf32, #tpu.memory_space<vmem>>, %arg2: memref<1x128xf32, #tpu.memory_space<vmem>>, %arg3: memref<1x128xf32, #tpu.memory_space<vmem>>, %arg4: memref<128x128xf32, #tpu.memory_space<vmem>>, %arg5: memref<1x128xf32, #tpu.memory_space<vmem>>, %arg6: memref<8x128xf32, #tpu.memory_space<vmem>>) attributes {dimension_semantics = [#tpu.dimension_semantics<parallel>], iteration_bounds = array<i64: 2>, scalar_prefetch = 0 : i64, scratch_operands = 0 : i64, tpu.core_type = #tpu.core_type<tc>, window_params = [{transform_indices = @transform_0, window_bounds = array<i64: 8, 128>}, {pipeline_mode = #tpu.pipeline_mode<synchronous>, transform_indices = @transform_1, window_bounds = array<i64: 1, 128>}, {pipeline_mode = #tpu.pipeline_mode<synchronous>, transform_indices = @transform_2, window_bounds = array<i64: 1, 128>}, {pipeline_mode = #tpu.pipeline_mode<synchronous>, transform_indices = @transform_3, window_bounds = array<i64: 128, 128>}, {pipeline_mode = #tpu.pipeline_mode<synchronous>, transform_indices = @transform_4, window_bounds = array<i64: 1, 128>}, {transform_indices = @transform_5, window_bounds = array<i64: 8, 128>}]} {
    %c0 = arith.constant 0 : index
    %c0_0 = arith.constant 0 : index
    %0 = vector.load %arg1[%c0, %c0_0] : memref<8x128xf32, #tpu.memory_space<vmem>>, vector<8x128xf32>
    %cst = arith.constant dense<0.000000e+00> : vector<8xf32>
    %1 = vector.multi_reduction <add>, %0, %cst [1] : vector<8x128xf32> to vector<8xf32>
    %2 = vector.shape_cast %1 : vector<8xf32> to vector<8x1xf32>
    %cst_1 = arith.constant 3.125000e-02 : f32
    %3 = vector.broadcast %cst_1 : f32 to vector<8x1xf32>
    %4 = arith.mulf %2, %3 : vector<8x1xf32>
    %5 = vector.broadcast %4 : vector<8x1xf32> to vector<8x128xf32>
    %6 = arith.subf %0, %5 : vector<8x128xf32>
    %7 = tpu.iota {dimensions = array<i32: 1>} : vector<8x128xi32>
    %c32_i32 = arith.constant 32 : i32
    %8 = vector.broadcast %c32_i32 : i32 to vector<8x128xi32>
    %9 = arith.cmpi slt, %7, %8 : vector<8x128xi32>
    %cst_2 = arith.constant 0.000000e+00 : f32
    %10 = vector.broadcast %cst_2 : f32 to vector<8x128xf32>
    %11 = arith.select %9, %6, %10 : vector<8x128xi1>, vector<8x128xf32>
    %12 = arith.mulf %11, %11 : vector<8x128xf32>
    %cst_3 = arith.constant dense<0.000000e+00> : vector<8xf32>
    %13 = vector.multi_reduction <add>, %12, %cst_3 [1] : vector<8x128xf32> to vector<8xf32>
    %14 = vector.shape_cast %13 : vector<8xf32> to vector<8x1xf32>
    %cst_4 = arith.constant 3.125000e-02 : f32
    %15 = vector.broadcast %cst_4 : f32 to vector<8x1xf32>
    %16 = arith.mulf %14, %15 : vector<8x1xf32>
    %cst_5 = arith.constant 9.99999974E-6 : f32
    %17 = vector.broadcast %cst_5 : f32 to vector<8x1xf32>
    %18 = arith.addf %16, %17 : vector<8x1xf32>
    %19 = math.rsqrt %18 : vector<8x1xf32>
    %20 = vector.broadcast %19 : vector<8x1xf32> to vector<8x128xf32>
    %21 = arith.mulf %11, %20 : vector<8x128xf32>
    %c0_6 = arith.constant 0 : index
    %c0_7 = arith.constant 0 : index
    %22 = vector.load %arg2[%c0_6, %c0_7] : memref<1x128xf32, #tpu.memory_space<vmem>>, vector<1x128xf32>
    %23 = vector.broadcast %22 : vector<1x128xf32> to vector<8x128xf32>
    %24 = arith.mulf %21, %23 : vector<8x128xf32>
    %c0_8 = arith.constant 0 : index
    %c0_9 = arith.constant 0 : index
    %25 = vector.load %arg3[%c0_8, %c0_9] : memref<1x128xf32, #tpu.memory_space<vmem>>, vector<1x128xf32>
    %26 = vector.broadcast %25 : vector<1x128xf32> to vector<8x128xf32>
    %27 = arith.addf %24, %26 : vector<8x128xf32>
    %c0_10 = arith.constant 0 : index
    %c0_11 = arith.constant 0 : index
    %28 = vector.load %arg4[%c0_10, %c0_11] : memref<128x128xf32, #tpu.memory_space<vmem>>, vector<128x128xf32>
    %cst_12 = arith.constant dense<0.000000e+00> : vector<8x128xf32>
    %29 = tpu.matmul %27, %28, %cst_12 {dimension_numbers = #tpu.dot_dimension_numbers<[1], [0], [0], [1], [0, 0, 1, 1], [], []>} : vector<8x128xf32>, vector<128x128xf32>, vector<8x128xf32> -> vector<8x128xf32>
    %c0_13 = arith.constant 0 : index
    %c0_14 = arith.constant 0 : index
    %30 = vector.load %arg5[%c0_13, %c0_14] : memref<1x128xf32, #tpu.memory_space<vmem>>, vector<1x128xf32>
    %31 = vector.broadcast %30 : vector<1x128xf32> to vector<8x128xf32>
    %32 = arith.addf %29, %31 : vector<8x128xf32>
    %33 = arith.addf %32, %0 : vector<8x128xf32>
    %c0_15 = arith.constant 0 : index
    %c0_16 = arith.constant 0 : index
    %34 = vector.load %arg6[%c0_15, %c0_16] : memref<8x128xf32, #tpu.memory_space<vmem>>, vector<8x128xf32>
    tpu.vector_store %arg6[%c0_15, %c0_16], %33 {strides = array<i32>} : memref<8x128xf32, #tpu.memory_space<vmem>>, vector<8x128xf32>,
    return
  }
  func.func @transform_0(%arg0: i32) -> (i32, i32) {
    %c0_i32 = arith.constant 0 : i32
    %c0_i32_0 = arith.constant 0 : i32
    return %arg0, %c0_i32 : i32, i32
  }
  func.func @transform_1(%arg0: i32) -> (i32, i32) {
    %c0_i32 = arith.constant 0 : i32
    %c0_i32_0 = arith.constant 0 : i32
    %c0_i32_1 = arith.constant 0 : i32
    return %c0_i32, %c0_i32_0 : i32, i32
  }
  func.func @transform_2(%arg0: i32) -> (i32, i32) {
    %c0_i32 = arith.constant 0 : i32
    %c0_i32_0 = arith.constant 0 : i32
    %c0_i32_1 = arith.constant 0 : i32
    return %c0_i32, %c0_i32_0 : i32, i32
  }
  func.func @transform_3(%arg0: i32) -> (i32, i32) {
    %c0_i32 = arith.constant 0 : i32
    %c0_i32_0 = arith.constant 0 : i32
    %c0_i32_1 = arith.constant 0 : i32
    return %c0_i32, %c0_i32_0 : i32, i32
  }
  func.func @transform_4(%arg0: i32) -> (i32, i32) {
    %c0_i32 = arith.constant 0 : i32
    %c0_i32_0 = arith.constant 0 : i32
    %c0_i32_1 = arith.constant 0 : i32
    return %c0_i32, %c0_i32_0 : i32, i32
  }
  func.func @transform_5(%arg0: i32) -> (i32, i32) {
    %c0_i32 = arith.constant 0 : i32
    %c0_i32_0 = arith.constant 0 : i32
    return %arg0, %c0_i32 : i32, i32
  }
}

</mosaic_0001>

<llo_original>
// kernel: tpu_custom_call.1
$region0: #{tpu_custom_call.1}
  #allocation0 [shape = 'u32[]', space=smem, size = 0x4, offset = 0x4, fixed_abs, tag = 'smem constant byte address 0x4 - core index']
  #allocation1 [shape = 'u32[144,128]{1,0:T(1,128)}', space=vmem, size = 0x12000, scoped, tag = 'internal scratch']
  %s0 = inlined_call_operand.hbm [shape: f32[16,128], index: 0, kind: input, shape index: {}]
  %s1 = inlined_call_operand.vmem [shape: f32[1,128], index: 1, kind: input, shape index: {}]
  %s2 = inlined_call_operand.vmem [shape: f32[1,128], index: 2, kind: input, shape index: {}]
  %s3 = inlined_call_operand.hbm [shape: f32[128,128], index: 3, kind: input, shape index: {}]
  %s4 = inlined_call_operand.vmem [shape: f32[1,128], index: 4, kind: input, shape index: {}]
  %s5 = inlined_call_operand.hbm [shape: f32[16,128], index: 5, kind: output, shape index: {}]
  %s6 = sld [smem:[#allocation0]]
  $region61: #{tpu_custom_call.1} parent=0
    _
  %s8 = ssub.s32 1, %s6
  %s9 = scalar_select 0, %s8, %s6
  $region1: #{tpu_custom_call.1} parent=0
    #allocation2 [shape = 'u8[8192]{0}', space=vmem, size = 0x2000, scoped, tag = 'input window, operand 0']
    #allocation3 [shape = 's32[2]{0}', space=sflag, size = 0x8, scoped, tag = 'scoped memory for tpu_custom_call.1']
    #allocation4 [shape = 's32[2]{0}', space=sflag, size = 0x8, scoped, tag = 'scoped memory for tpu_custom_call.1']
    #allocation5 [shape = 'u8[65536]{0}', space=vmem, size = 0x10000, scoped, tag = 'input window, operand 3, single buffered']
    #allocation6 [shape = 's32[1]{0}', space=sflag, size = 0x4, scoped, tag = 'scoped memory for tpu_custom_call.1']
    #allocation7 [shape = 'u8[8192]{0}', space=vmem, size = 0x2000, scoped, tag = 'output window, operand 0']
    %10 = vsyncpa [#allocation3], 0
    %s11 = scalar_lea.sflag [#allocation3], 1
    %12 = vsyncpa %s11, 0
    %13 = vsyncpa [#allocation6], 0
    %14 = vsyncpa [#allocation4], 0
    %s15 = scalar_lea.sflag [#allocation4], 1
    %16 = vsyncpa %s15, 0
    loop: start=0, step=1, limit=4
    $region2: #{tpu_custom_call.1} parent=1 // loop_pre_header
      _
    $region3: #{tpu_custom_call.1} parent=1 // loop_header
      %s18 = sphi 0, %s22
      %p19 = scmp.ge.s32.totalorder %s18, 4
      %s28 = sphi 0, %s30
      %s31 = sphi 0, %s28
      %s32 = sphi 0, %s31
      %s48 = sphi 0, %s32
      %s52 = sphi 0, %s52
      %s54 = sphi 0, %s52
      %s55 = sphi 0, %s54
      %s69 = sphi 0, %s55
      %s73 = sphi 0, %s73
      %s75 = sphi 0, %s73
      %s76 = sphi 0, %s75
      %s90 = sphi 0, %s76
      %s94 = sphi 0, %s94
      %s96 = sphi 0, %s94
      %s97 = sphi 0, %s96
      %s111 = sphi 0, %s97
      %s115 = sphi 0, %s115
      %s117 = sphi 0, %s115
      %s118 = sphi 0, %s117
      %s132 = sphi 0, %s118
      %s138 = sphi 0, %s140
      %s141 = sphi 0, %s138
      %s142 = sphi 0, %s141
      %s158 = sphi 0, %s142
    $region4: #{tpu_custom_call.1} parent=1 // loop_header_branch
      %21 = sbr.rel (%p19) target = $region8
    $region5: #{tpu_custom_call.1} parent=1 // loop_body
      %s23 = ssub.s32 %s18, 1
      %s24 = ssub.s32 %s18, 2
      %s25 = sadd.s32 %s18, 1
      %s26 = ssub.s32 %s18, %s25
      %p27 = scmp.eq.s32.totalorder %s26, 0
      %s29 = sadd.s32 %s28, 1
      %s30 = scalar_select %p27, %s28, %s29
      %p33 = pneg %p27
      %p34 = scmp.eq.s32.totalorder %s18, 1
      %p35 = por %p33, %p34
      %p36 = scmp.ne.s32.totalorder %s28, %s31
      %p37 = scmp.eq.s32.totalorder %s18, 0
      %p38 = por %p36, %p37
      %p39 = scmp.ne.s32.totalorder %s28, %s31
      %p40 = scmp.eq.s32.totalorder %s23, 1
      %p41 = por %p39, %p40
      %p42 = scmp.ne.s32.totalorder %s31, %s32
      %p43 = scmp.eq.s32.totalorder %s23, 0
      %p44 = por %p42, %p43
      %p45 = scmp.ne.s32.totalorder %s31, %s32
      %p46 = scmp.eq.s32.totalorder %s24, 1
      %p47 = por %p45, %p46
      %p49 = scmp.ne.s32.totalorder %s32, %s48
      %p50 = scmp.eq.s32.totalorder %s24, 0
      %p51 = por %p49, %p50
      %s53 = sadd.s32 %s52, 1
      %p56 = scmp.eq.s32.totalorder %s18, 1
      %p57 = scmp.ne.s32.totalorder %s52, %s54
      %p58 = scmp.eq.s32.totalorder %s18, 0
      %p59 = por %p57, %p58
      %p60 = scmp.ne.s32.totalorder %s52, %s54
      %p61 = scmp.eq.s32.totalorder %s23, 1
      %p62 = por %p60, %p61
      %p63 = scmp.ne.s32.totalorder %s54, %s55
      %p64 = scmp.eq.s32.totalorder %s23, 0
      %p65 = por %p63, %p64
      %p66 = scmp.ne.s32.totalorder %s54, %s55
      %p67 = scmp.eq.s32.totalorder %s24, 1
      %p68 = por %p66, %p67
      %p70 = scmp.ne.s32.totalorder %s55, %s69
      %p71 = scmp.eq.s32.totalorder %s24, 0
      %p72 = por %p70, %p71
      %s74 = sadd.s32 %s73, 1
      %p77 = scmp.eq.s32.totalorder %s18, 1
      %p78 = scmp.ne.s32.totalorder %s73, %s75
      %p79 = scmp.eq.s32.totalorder %s18, 0
      %p80 = por %p78, %p79
      %p81 = scmp.ne.s32.totalorder %s73, %s75
      %p82 = scmp.eq.s32.totalorder %s23, 1
      %p83 = por %p81, %p82
      %p84 = scmp.ne.s32.totalorder %s75, %s76
      %p85 = scmp.eq.s32.totalorder %s23, 0
      %p86 = por %p84, %p85
      %p87 = scmp.ne.s32.totalorder %s75, %s76
      %p88 = scmp.eq.s32.totalorder %s24, 1
      %p89 = por %p87, %p88
      %p91 = scmp.ne.s32.totalorder %s76, %s90
      %p92 = scmp.eq.s32.totalorder %s24, 0
      %p93 = por %p91, %p92
      %s95 = sadd.s32 %s94, 1
      %p98 = scmp.eq.s32.totalorder %s18, 1
      %p99 = scmp.ne.s32.totalorder %s94, %s96
      %p100 = scmp.eq.s32.totalorder %s18, 0
      %p101 = por %p99, %p100
      %p102 = scmp.ne.s32.totalorder %s94, %s96
      %p103 = scmp.eq.s32.totalorder %s23, 1
      %p104 = por %p102, %p103
      %p105 = scmp.ne.s32.totalorder %s96, %s97
      %p106 = scmp.eq.s32.totalorder %s23, 0
      %p107 = por %p105, %p106
      %p108 = scmp.ne.s32.totalorder %s96, %s97
      %p109 = scmp.eq.s32.totalorder %s24, 1
      %p110 = por %p108, %p109
      %p112 = scmp.ne.s32.totalorder %s97, %s111
      %p113 = scmp.eq.s32.totalorder %s24, 0
      %p114 = por %p112, %p113
      %s116 = sadd.s32 %s115, 1
      %p119 = scmp.eq.s32.totalorder %s18, 1
      %p120 = scmp.ne.s32.totalorder %s115, %s117
      %p121 = scmp.eq.s32.totalorder %s18, 0
      %p122 = por %p120, %p121
      %p123 = scmp.ne.s32.totalorder %s115, %s117
      %p124 = scmp.eq.s32.totalorder %s23, 1
      %p125 = por %p123, %p124
      %p126 = scmp.ne.s32.totalorder %s117, %s118
      %p127 = scmp.eq.s32.totalorder %s23, 0
      %p128 = por %p126, %p127
      %p129 = scmp.ne.s32.totalorder %s117, %s118
      %p130 = scmp.eq.s32.totalorder %s24, 1
      %p131 = por %p129, %p130
      %p133 = scmp.ne.s32.totalorder %s118, %s132
      %p134 = scmp.eq.s32.totalorder %s24, 0
      %p135 = por %p133, %p134
      %s136 = ssub.s32 %s18, %s25
      %p137 = scmp.eq.s32.totalorder %s136, 0
      %s139 = sadd.s32 %s138, 1
      %s140 = scalar_select %p137, %s138, %s139
      %p143 = pneg %p137
      %p144 = scmp.eq.s32.totalorder %s18, 1
      %p145 = por %p143, %p144
      %p146 = scmp.ne.s32.totalorder %s138, %s141
      %p147 = scmp.eq.s32.totalorder %s18, 0
      %p148 = por %p146, %p147
      %p149 = scmp.ne.s32.totalorder %s138, %s141
      %p150 = scmp.eq.s32.totalorder %s23, 1
      %p151 = por %p149, %p150
      %p152 = scmp.ne.s32.totalorder %s141, %s142
      %p153 = scmp.eq.s32.totalorder %s23, 0
      %p154 = por %p152, %p153
      %p155 = scmp.ne.s32.totalorder %s141, %s142
      %p156 = scmp.eq.s32.totalorder %s24, 1
      %p157 = por %p155, %p156
      %p159 = scmp.ne.s32.totalorder %s142, %s158
      %p160 = scmp.eq.s32.totalorder %s24, 0
      %p161 = por %p159, %p160
      %p162 = scmp.le.s32.totalorder 1, %s18
      %p163 = scmp.lt.s32.totalorder %s18, 3
      %p164 = pnand %p162, %p163
      %p165 = pneg %p164
      // Predicated region
      $region9: #{tpu_custom_call.1} parent=5 // pred_check
        _
      $region10: #{tpu_custom_call.1} parent=5 // pred_check_branch
        %167 = sbr.rel (%p164) target = $region12
      $region11: #{tpu_custom_call.1} parent=5 // pred_region
        %s168 = ssub.s32 %s18, 1
        // Predicated region
        $region13: #{tpu_custom_call.1} parent=11 // pred_check
          %p169 = pneg %p65
        $region14: #{tpu_custom_call.1} parent=11 // pred_check_branch
          %171 = sbr.rel (%p169) target = $region16
        $region15: #{tpu_custom_call.1} parent=11 // pred_region
          _
        $region16: #{tpu_custom_call.1} parent=11 // pred_fallthru
          _
        // Predicated region
        $region17: #{tpu_custom_call.1} parent=11 // pred_check
          %p172 = pneg %p86
        $region18: #{tpu_custom_call.1} parent=11 // pred_check_branch
          %174 = sbr.rel (%p172) target = $region20
        $region19: #{tpu_custom_call.1} parent=11 // pred_region
          _
        $region20: #{tpu_custom_call.1} parent=11 // pred_fallthru
          _
        // Predicated region
        $region21: #{tpu_custom_call.1} parent=11 // pred_check
          %p175 = pneg %p107
        $region22: #{tpu_custom_call.1} parent=11 // pred_check_branch
          %177 = sbr.rel (%p175) target = $region24
        $region23: #{tpu_custom_call.1} parent=11 // pred_region
          %s179 = ssub.s32 2048, 2048
          %180 = vsyncadd [#allocation6], %s179
          %s181 = sshll.u32 [#allocation5], 4
          %s182 = int_to_ptr.vmem [resolvable:$true] %s181
          %187 = dma.hbm_to_vmem [thread:$0]  %s3, 2048, %s182, [#allocation6], 128, 128, 8
        $region24: #{tpu_custom_call.1} parent=11 // pred_fallthru
          _
        // Predicated region
        $region25: #{tpu_custom_call.1} parent=11 // pred_check
          %p188 = pneg %p128
        $region26: #{tpu_custom_call.1} parent=11 // pred_check_branch
          %190 = sbr.rel (%p188) target = $region28
        $region27: #{tpu_custom_call.1} parent=11 // pred_region
          _
        $region28: #{tpu_custom_call.1} parent=11 // pred_fallthru
          _
      $region12: #{tpu_custom_call.1} parent=5 // pred_fallthru
        _
      %p191 = scmp.lt.s32.totalorder %s18, 2
      // Predicated region
      $region29: #{tpu_custom_call.1} parent=5 // pred_check
        %p192 = pneg %p191
      $region30: #{tpu_custom_call.1} parent=5 // pred_check_branch
        %194 = sbr.rel (%p192) target = $region32
      $region31: #{tpu_custom_call.1} parent=5 // pred_region
        // Predicated region
        $region33: #{tpu_custom_call.1} parent=31 // pred_check
          %p195 = pneg %p38
        $region34: #{tpu_custom_call.1} parent=31 // pred_check_branch
          %197 = sbr.rel (%p195) target = $region36
        $region35: #{tpu_custom_call.1} parent=31 // pred_region
          %s198 = sand.u32 %s28, 1
          %s199 = scalar_lea.sflag [#allocation3], %s198
          %s200 = sand.u32 %s28, 1
          %s201 = smul.addr %s200, 8
          %s202 = scalar_lea.vmem [#allocation2], %s201
          %s204 = ssub.s32 128, 128
          %205 = vsyncadd %s199, %s204
          %s206 = smul.addr %s18, 128
          %s207 = scalar_lea.hbm %s0, %s206
          %s209 = sshll.u32 %s202, 4
          %s210 = int_to_ptr.vmem [resolvable:$true] %s209
          %212 = dma.hbm_to_vmem [thread:$0]  %s207, 128, %s210, %s199
        $region36: #{tpu_custom_call.1} parent=31 // pred_fallthru
          _
      $region32: #{tpu_custom_call.1} parent=5 // pred_fallthru
        _
      %p213 = scmp.le.s32.totalorder 1, %s18
      %p214 = scmp.lt.s32.totalorder %s18, 3
      %p215 = pnand %p213, %p214
      %p216 = pneg %p215
      // Predicated region
      $region37: #{tpu_custom_call.1} parent=5 // pred_check
        _
      $region38: #{tpu_custom_call.1} parent=5 // pred_check_branch
        %218 = sbr.rel (%p215) target = $region40
      $region39: #{tpu_custom_call.1} parent=5 // pred_region
        %s219 = ssub.s32 %s18, 1
        %s220 = sand.u32 %s31, 1
        %s221 = scalar_lea.sflag [#allocation3], %s220
        %s222 = sand.u32 %s31, 1
        %s223 = smul.addr %s222, 8
        %s224 = scalar_lea.vmem [#allocation2], %s223
        // Predicated region
        $region41: #{tpu_custom_call.1} parent=39 // pred_check
          %p225 = pneg %p44
        $region42: #{tpu_custom_call.1} parent=39 // pred_check_branch
          %227 = sbr.rel (%p225) target = $region44
        $region43: #{tpu_custom_call.1} parent=39 // pred_region
          %228 = dma.done %s221, 128
        $region44: #{tpu_custom_call.1} parent=39 // pred_fallthru
          _
        // Predicated region
        $region45: #{tpu_custom_call.1} parent=39 // pred_check
          %p229 = pneg %p107
        $region46: #{tpu_custom_call.1} parent=39 // pred_check_branch
          %231 = sbr.rel (%p229) target = $region48
        $region47: #{tpu_custom_call.1} parent=39 // pred_region
          %232 = dma.done [#allocation6], 2048
        $region48: #{tpu_custom_call.1} parent=39 // pred_fallthru
          _
        %s233 = sand.u32 %s31, 1
        %s234 = scalar_lea.sflag [#allocation3], %s233
        %s235 = sand.u32 %s31, 1
        %s236 = smul.addr %s235, 8
        %s237 = scalar_lea.vmem [#allocation2], %s236
        %p238 = pneg %p44
        %p239 = pneg %p41
        %p240 = pneg %p65
        %p241 = pneg %p62
        %p242 = pneg %p86
        %p243 = pneg %p83
        %p244 = pneg %p107
        %p245 = pneg %p104
        %p246 = pneg %p128
        %p247 = pneg %p125
        %p248 = pneg %p154
        %p249 = pneg %p151
        %s250 = sand.u32 %s141, 1
        %s251 = scalar_lea.sflag [#allocation4], %s250
        %s252 = sand.u32 %s141, 1
        %s253 = smul.addr %s252, 8
        %s254 = scalar_lea.vmem [#allocation7], %s253
        %v255 = vld [vmem:[%s224] sm:$0xff]
        %256 = vadd.xlane.f32.xlu0 %v255
        %v257 = vpop.xlane.xlu0 %256
        %v258 = vmul.f32 %v257, 0.03125
        %v259 = vsub.f32 %v255, %v258
        %v260 = vlaneseq
        %v261 = vand.u32 %v260, 127
        %vm262 = vcmp.lt.s32.totalorder %v261, 32
        %v263 = vsel %vm262, %v259, 0.0
        %v264 = vmul.f32 %v263, %v263
        %265 = vadd.xlane.f32.xlu0 %v264
        %v266 = vpop.xlane.xlu0 %265
        %v267 = vmul.f32 %v266, 0.03125
        %v268 = vadd.f32 %v267, 1e-05
        %v269 = vrsqrt.pop %v268
        %v270 = vmul.f32 %v263, %v269
        %v271 = vld [vmem:[%s1] sm:$0x1]
        %v273 = vlaneseq
        %v274 = vshrl.u32 %v273, 7
        %v275 = vsub.s32 0, %v274
        %v276 = vrot.slane %v271, %v275
        %v278 = vmul.f32 %v270, %v276
        %v279 = vld [vmem:[%s2] sm:$0x1]
        %v281 = vlaneseq
        %v282 = vshrl.u32 %v281, 7
        %v283 = vsub.s32 0, %v282
        %v284 = vrot.slane %v279, %v283
        %v286 = vadd.f32 %v278, %v284
        %v287 = vld [vmem:[#allocation5] sm:$0xff]
        %v288 = vld [vmem:[#allocation5 + $0x8] sm:$0xff]
        %v289 = vld [vmem:[#allocation5 + $0x10] sm:$0xff]
        %v290 = vld [vmem:[#allocation5 + $0x18] sm:$0xff]
        %v291 = vld [vmem:[#allocation5 + $0x20] sm:$0xff]
        %v292 = vld [vmem:[#allocation5 + $0x28] sm:$0xff]
        %v293 = vld [vmem:[#allocation5 + $0x30] sm:$0xff]
        %v294 = vld [vmem:[#allocation5 + $0x38] sm:$0xff]
        %v295 = vld [vmem:[#allocation5 + $0x40] sm:$0xff]
        %v296 = vld [vmem:[#allocation5 + $0x48] sm:$0xff]
        %v297 = vld [vmem:[#allocation5 + $0x50] sm:$0xff]
        %v298 = vld [vmem:[#allocation5 + $0x58] sm:$0xff]
        %v299 = vld [vmem:[#allocation5 + $0x60] sm:$0xff]
        %v300 = vld [vmem:[#allocation5 + $0x68] sm:$0xff]
        %v301 = vld [vmem:[#allocation5 + $0x70] sm:$0xff]
        %v302 = vld [vmem:[#allocation5 + $0x78] sm:$0xff]
        %v303 = vld [vmem:[%s4] sm:$0x1]
        %v305 = vlaneseq
        %v306 = vshrl.u32 %v305, 7
        %v307 = vsub.s32 0, %v306
        %v308 = vrot.slane %v303, %v307
        %310 = vmatprep.subr.mxu0 0.0
        %311 = vmatpush1.msra.mxu0 %v287
        %312 = vmatprep.subr.mxu0 0.0
        %313 = vmatpush1.msra.mxu0 %v288
        %314 = vmatprep.subr.mxu0 0.0
        %315 = vmatpush1.msra.mxu0 %v289
        %316 = vmatprep.subr.mxu0 0.0
        %317 = vmatpush1.msra.mxu0 %v290
        %318 = vmatprep.subr.mxu0 0.0
        %319 = vmatpush1.msra.mxu0 %v291
        %320 = vmatprep.subr.mxu0 0.0
        %321 = vmatpush1.msra.mxu0 %v292
        %322 = vmatprep.subr.mxu0 0.0
        %323 = vmatpush1.msra.mxu0 %v293
        %324 = vmatprep.subr.mxu0 0.0
        %325 = vmatpush1.msra.mxu0 %v294
        %326 = vmatprep.subr.mxu0 0.0
        %327 = vmatpush1.msra.mxu0 %v295
        %328 = vmatprep.subr.mxu0 0.0
        %329 = vmatpush1.msra.mxu0 %v296
        %330 = vmatprep.subr.mxu0 0.0
        %331 = vmatpush1.msra.mxu0 %v297
        %332 = vmatprep.subr.mxu0 0.0
        %333 = vmatpush1.msra.mxu0 %v298
        %334 = vmatprep.subr.mxu0 0.0
        %335 = vmatpush1.msra.mxu0 %v299
        %336 = vmatprep.subr.mxu0 0.0
        %337 = vmatpush1.msra.mxu0 %v300
        %338 = vmatprep.subr.mxu0 0.0
        %339 = vmatpush1.msra.mxu0 %v301
        %340 = vmatprep.subr.mxu0 0.0
        %341 = vmatpush1.msra.mxu0 %v302
        %342 = vmatprep.subr.mxu0 0.0
        %343 = vmatpush1.msra.mxu0 0.0
        %344 = vmatprep.subr.mxu0 0.0
        %345 = vmatpush1.msra.mxu0 0.0
        %346 = vmatprep.subr.mxu0 0.0
        %347 = vmatpush1.msra.mxu0 0.0
        %348 = vmatprep.subr.mxu0 0.0
        %349 = vmatpush1.msra.mxu0 0.0
        %350 = vmatprep.subr.mxu0 0.0
        %351 = vmatpush1.msra.mxu0 0.0
        %352 = vmatprep.subr.mxu0 0.0
        %353 = vmatpush1.msra.mxu0 0.0
        %354 = vmatprep.subr.mxu0 0.0
        %355 = vmatpush1.msra.mxu0 0.0
        %356 = vmatprep.subr.mxu0 0.0
        %357 = vmatpush1.msra.mxu0 0.0
        %358 = vmatprep.subr.mxu0 0.0
        %359 = vmatpush1.msra.mxu0 0.0
        %360 = vmatprep.subr.mxu0 0.0
        %361 = vmatpush1.msra.mxu0 0.0
        %362 = vmatprep.subr.mxu0 0.0
        %363 = vmatpush1.msra.mxu0 0.0
        %364 = vmatprep.subr.mxu0 0.0
        %365 = vmatpush1.msra.mxu0 0.0
        %366 = vmatprep.subr.mxu0 0.0
        %367 = vmatpush1.msra.mxu0 0.0
        %368 = vmatprep.subr.mxu0 0.0
        %369 = vmatpush1.msra.mxu0 0.0
        %370 = vmatprep.subr.mxu0 0.0
        %371 = vmatpush1.msra.mxu0 0.0
        %372 = vmatprep.subr.mxu0 0.0
        %373 = vmatpush1.msra.mxu0 0.0
        %374 = vmatprep.mubr.f32.mxu0 0.0
        %375 = vmatmul.mubr.f32.gmra.mrb[0].mxu0 %v286
        %v376 = vpop.f32.mrb[0].mxu0
        %v377 = vadd.f32 %v308, %v376
        %v378 = vpop.f32.mrb[0].mxu0
        %379 = vdwg.mxu0
        %v380 = vadd.f32 %v377, %v255
        %381 = vst [vmem:[%s254] sm:$0xff] %v380
        %s382 = sand.u32 %s141, 1
        %s383 = scalar_lea.sflag [#allocation4], %s382
        %s384 = sand.u32 %s141, 1
        %s385 = smul.addr %s384, 8
        %s386 = scalar_lea.vmem [#allocation7], %s385
        // Predicated region
        $region49: #{tpu_custom_call.1} parent=39 // pred_check
          %p387 = pneg %p151
        $region50: #{tpu_custom_call.1} parent=39 // pred_check_branch
          %389 = sbr.rel (%p387) target = $region52
        $region51: #{tpu_custom_call.1} parent=39 // pred_region
          %s391 = ssub.s32 128, 128
          %392 = vsyncadd %s383, %s391
          %s393 = smul.addr %s23, 128
          %s394 = scalar_lea.hbm %s5, %s393
          %s396 = sshll.u32 %s386, 4
          %s397 = int_to_ptr.vmem [resolvable:$true] %s396
          %399 = dma.vmem_to_hbm [thread:$0]  %s397, 128, %s394, %s383
        $region52: #{tpu_custom_call.1} parent=39 // pred_fallthru
          _
      $region40: #{tpu_custom_call.1} parent=5 // pred_fallthru
        _
      %p400 = scmp.le.s32.totalorder 2, %s18
      // Predicated region
      $region53: #{tpu_custom_call.1} parent=5 // pred_check
        %p401 = pneg %p400
      $region54: #{tpu_custom_call.1} parent=5 // pred_check_branch
        %403 = sbr.rel (%p401) target = $region56
      $region55: #{tpu_custom_call.1} parent=5 // pred_region
        %s404 = ssub.s32 %s18, 2
        // Predicated region
        $region57: #{tpu_custom_call.1} parent=55 // pred_check
          %p405 = pneg %p157
        $region58: #{tpu_custom_call.1} parent=55 // pred_check_branch
          %407 = sbr.rel (%p405) target = $region60
        $region59: #{tpu_custom_call.1} parent=55 // pred_region
          %s408 = sand.u32 %s142, 1
          %s409 = scalar_lea.sflag [#allocation4], %s408
          %s410 = sand.u32 %s142, 1
          %s411 = smul.addr %s410, 8
          %s412 = scalar_lea.vmem [#allocation7], %s411
          %413 = dma.done %s409, 128
        $region60: #{tpu_custom_call.1} parent=55 // pred_fallthru
          _
      $region56: #{tpu_custom_call.1} parent=5 // pred_fallthru
        _
    $region6: #{tpu_custom_call.1} parent=1 // loop_footer
      %s22 = sadd.s32 1, %s18
    $region7: #{tpu_custom_call.1} parent=1 // loop_footer_branch
      %17 = sbr.rel target = $region3
    $region8: #{tpu_custom_call.1} parent=1 // loop_exit
      _
    %414 = vsyncpa [#allocation3], 1
    %s415 = scalar_lea.sflag [#allocation3], 1
    %416 = vsyncpa %s415, 1
    %417 = vsyncpa [#allocation6], 1
    %418 = vsyncpa [#allocation4], 1
    %s419 = scalar_lea.sflag [#allocation4], 1
    %420 = vsyncpa %s419, 1

</llo_original>
